<compile_context>
chip_gen: v7x
topology: tpu7x:2x2x1
jax: 0.10.0
libtpu: 0.0.40
codegen_flags: <defaults>
</compile_context>

<pallas_src>
import jax
import jax.numpy as jnp
from jax.experimental import pallas as pl
from jax.experimental.pallas import tpu as pltpu


# ---------------------------------------------------------------------------
# Kernel: sequential LSTM recurrence over one time-chunk per grid step.
# ---------------------------------------------------------------------------
def _lstm_recurrence_kernel(gx_ref, whh_ref, wfc_ref, bfc_ref, out_ref,
                            h_scr, c_scr):
    chunk = pl.program_id(0)
    Tc = gx_ref.shape[0]          # timesteps in this chunk (static)
    H = whh_ref.shape[0]
    cd = whh_ref.dtype            # matmul operand dtype (bf16 by default)

    @pl.when(chunk == 0)
    def _():
        h_scr[...] = jnp.zeros_like(h_scr)
        c_scr[...] = jnp.zeros_like(c_scr)

    def step(t, carry):
        h, c = carry
        # gates = (x_t @ W_ih^T + b_ih + b_hh)  [precomputed, f32]
        #         + h_{t-1} @ W_hh^T            [bf16 operands, f32 accum]
        gates = gx_ref[t] + jnp.dot(h.astype(cd), whh_ref[...],
                                    preferred_element_type=jnp.float32)
        # PyTorch gate order: input, forget, cell(g), output.
        i_g = jax.nn.sigmoid(gates[:, 0 * H:1 * H])
        f_g = jax.nn.sigmoid(gates[:, 1 * H:2 * H])
        g_g = jnp.tanh(gates[:, 2 * H:3 * H])
        o_g = jax.nn.sigmoid(gates[:, 3 * H:4 * H])
        c = f_g * c + i_g * g_g
        h = o_g * jnp.tanh(c)
        return h, c

    h, c = jax.lax.fori_loop(0, Tc, step, (h_scr[...], c_scr[...]),
                             unroll=(Tc <= 16))
    h_scr[...] = h
    c_scr[...] = c

    @pl.when(chunk == pl.num_programs(0) - 1)
    def _():
        # Dropout on out[:, -1, :] is identity in eval/inference mode.
        # TODO(synk): training-mode dropout (random mask) not implemented.
        out_ref[...] = (jnp.dot(h.astype(cd), wfc_ref[...],
                                preferred_element_type=jnp.float32)
                        + bfc_ref[...]).astype(out_ref.dtype)


# ---------------------------------------------------------------------------
# Wrapper
# ---------------------------------------------------------------------------
def _pick_time_chunk(T, max_chunk=128):
    tc = min(T, max_chunk)
    while T % tc:
        tc -= 1
    return tc


def _ceil_to(n, m):
    return (n + m - 1) // m * m


def lstm_forward(x, params, *, compute_dtype=jnp.bfloat16, max_time_chunk=128):
    """x: (B, T, I) float32. Returns (B, output_size) float32."""
    w_ih, w_hh, b_ih, b_hh, w_fc, b_fc = params
    B, T, I = x.shape
    H = w_hh.shape[1]
    O = w_fc.shape[0]
    cd = compute_dtype

    # --- Hoisted input projection (one big MXU-friendly GEMM, fused transpose).
    # gates_x[t, b, :] = x[b, t, :] @ W_ih^T + (b_ih + b_hh)      -> (T, B, 4H) f32
    gates_x = (jnp.einsum("bti,gi->tbg", x.astype(cd), w_ih.astype(cd),
                          preferred_element_type=jnp.float32)
               + (b_ih + b_hh).astype(jnp.float32)[None, None, :])

    whh_t = jnp.transpose(w_hh).astype(cd)             # (H, 4H)  bf16
    wfc_t = jnp.transpose(w_fc).astype(cd)             # (H, O)   bf16
    bfc = b_fc.astype(jnp.float32).reshape(1, O)       # (1, O)   f32

    Tc = _pick_time_chunk(T, max_time_chunk)
    n_chunks = T // Tc

    # Rough padded VMEM footprint (for an explicit scoped-VMEM limit).
    cd_bytes = jnp.dtype(cd).itemsize
    Bp, Hp4, Hp, Op = _ceil_to(B, 8), _ceil_to(4 * H, 128), _ceil_to(H, 128), _ceil_to(O, 128)
    vmem_est = (
        2 * Tc * Bp * Hp4 * 4            # gates_x chunk (double-buffered)
        + 2 * _ceil_to(H, 8) * Hp4 * cd_bytes   # W_hh^T
        + 2 * _ceil_to(H, 8) * Op * cd_bytes    # W_fc^T
        + 2 * 8 * Op * 4                 # b_fc
        + 2 * Bp * Op * 4                # output block
        + 2 * Bp * Hp * 4                # h, c scratch
    )
    vmem_limit = int(min(max(4 * vmem_est, 16 * 1024 * 1024), 48 * 1024 * 1024))

    grid_spec = pltpu.PrefetchScalarGridSpec(
        num_scalar_prefetch=0,
        grid=(n_chunks,),
        in_specs=[
            pl.BlockSpec((Tc, B, 4 * H), lambda c: (c, 0, 0)),   # gates_x chunk
            pl.BlockSpec((H, 4 * H), lambda c: (0, 0)),          # W_hh^T (invariant)
            pl.BlockSpec((H, O), lambda c: (0, 0)),              # W_fc^T (invariant)
            pl.BlockSpec((1, O), lambda c: (0, 0)),              # b_fc   (invariant)
        ],
        out_specs=pl.BlockSpec((B, O), lambda c: (0, 0)),
        scratch_shapes=[
            pltpu.VMEM((B, H), jnp.float32),   # h (persists across chunks)
            pltpu.VMEM((B, H), jnp.float32),   # c
        ],
    )

    return pl.pallas_call(
        _lstm_recurrence_kernel,
        out_shape=jax.ShapeDtypeStruct((B, O), jnp.float32),
        grid_spec=grid_spec,
        compiler_params=pltpu.CompilerParams(
            dimension_semantics=("arbitrary",),   # time is inherently serial
            vmem_limit_bytes=vmem_limit),
    )(gates_x, whh_t, wfc_t, bfc)


# ---------------------------------------------------------------------------
# Pure-JAX reference (PyTorch nn.LSTM + Linear semantics, eval mode).
# `compute_dtype` lets us mirror the kernel's bf16-operand / f32-accum math.
# ---------------------------------------------------------------------------
def _jax_reference(x, params, compute_dtype=jnp.float32):
    w_ih, w_hh, b_ih, b_hh, w_fc, b_fc = params
    cd = compute_dtype
    B, T, I = x.shape
    H = w_hh.shape[1]

    gates_x = (jnp.einsum("bti,gi->tbg", x.astype(cd), w_ih.astype(cd),
                          preferred_element_type=jnp.float32)
               + (b_ih + b_hh).astype(jnp.float32)[None, None, :])
    whh_t = w_hh.T.astype(cd)

    def step(carry, gx_t):
        h, c = carry
        gates = gx_t + jnp.dot(h.astype(cd), whh_t,
                               preferred_element_type=jnp.float32)
        i = jax.nn.sigmoid(gates[:, 0 * H:1 * H])
        f = jax.nn.sigmoid(gates[:, 1 * H:2 * H])
        g = jnp.tanh(gates[:, 2 * H:3 * H])
        o = jax.nn.sigmoid(gates[:, 3 * H:4 * H])
        c = f * c + i * g
        h = o * jnp.tanh(c)
        return (h, c), None

    h0 = jnp.zeros((B, H), jnp.float32)
    c0 = jnp.zeros((B, H), jnp.float32)
    (h, c), _ = jax.lax.scan(step, (h0, c0), gates_x)
    return (jnp.dot(h.astype(cd), w_fc.T.astype(cd),
                    preferred_element_type=jnp.float32)
            + b_fc.astype(jnp.float32))


def init_params(key, input_size, hidden_size, output_size):
    ks = jax.random.split(key, 6)
    k = 1.0 / jnp.sqrt(hidden_size)
    w_ih = jax.random.uniform(ks[0], (4 * hidden_size, input_size),
                              jnp.float32, -k, k)
    w_hh = jax.random.uniform(ks[1], (4 * hidden_size, hidden_size),
                              jnp.float32, -k, k)
    b_ih = jax.random.uniform(ks[2], (4 * hidden_size,), jnp.float32, -k, k)
    b_hh = jax.random.uniform(ks[3], (4 * hidden_size,), jnp.float32, -k, k)
    kf = 1.0 / jnp.sqrt(hidden_size)
    w_fc = jax.random.uniform(ks[4], (output_size, hidden_size),
                              jnp.float32, -kf, kf)
    b_fc = jax.random.uniform(ks[5], (output_size,), jnp.float32, -kf, kf)
    return (w_ih, w_hh, b_ih, b_hh, w_fc, b_fc)


if __name__ == "__main__":
    B, T, INPUT, HIDDEN, OUTPUT = 2, 8, 16, 32, 8

    key = jax.random.PRNGKey(0)
    k_x, k_p = jax.random.split(key)
    x = jax.random.normal(k_x, (B, T, INPUT), jnp.float32)
    params = init_params(k_p, INPUT, HIDDEN, OUTPUT)

    out = jax.block_until_ready(lstm_forward(x, params))
    assert out.shape == (B, OUTPUT)

    # Tight check vs. a reference using the same bf16-operand / f32-accum math.
    ref_matched = jax.block_until_ready(_jax_reference(x, params, jnp.bfloat16))
    assert jnp.allclose(out, ref_matched, atol=2e-3, rtol=2e-3), \
        "mismatch vs matched-precision reference"

    # Loose check vs. the full-f32 (PyTorch-exact) reference.
    ref_f32 = jax.block_until_ready(_jax_reference(x, params, jnp.float32))
    assert jnp.allclose(out, ref_f32, atol=5e-2, rtol=5e-2), \
        "mismatch vs f32 reference"

    print("KERNEL_OK")
</pallas_src>

<mosaic_0001>
module attributes {stable_mosaic.version = 11 : i64} {
  func.func @_lstm_recurrence_kernel(%arg0: i32, %arg1: memref<8x2x128xf32, #tpu.memory_space<vmem>>, %arg2: memref<32x128xbf16, #tpu.memory_space<vmem>>, %arg3: memref<32x8xbf16, #tpu.memory_space<vmem>>, %arg4: memref<1x8xf32, #tpu.memory_space<vmem>>, %arg5: memref<2x8xf32, #tpu.memory_space<vmem>>, %arg6: memref<2x32xf32, #tpu.memory_space<vmem>>, %arg7: memref<2x32xf32, #tpu.memory_space<vmem>>) attributes {dimension_semantics = [#tpu.dimension_semantics<arbitrary>], iteration_bounds = array<i64: 1>, scalar_prefetch = 0 : i64, scratch_operands = 2 : i64, tpu.core_type = #tpu.core_type<tc>, window_params = [{transform_indices = @transform_0, window_bounds = array<i64: 8, 2, 128>}, {pipeline_mode = #tpu.pipeline_mode<synchronous>, transform_indices = @transform_1, window_bounds = array<i64: 32, 128>}, {pipeline_mode = #tpu.pipeline_mode<synchronous>, transform_indices = @transform_2, window_bounds = array<i64: 32, 8>}, {pipeline_mode = #tpu.pipeline_mode<synchronous>, transform_indices = @transform_3, window_bounds = array<i64: 1, 8>}, {pipeline_mode = #tpu.pipeline_mode<synchronous>, transform_indices = @transform_4, window_bounds = array<i64: 2, 8>}]} {
    %c0_i32 = arith.constant 0 : i32
    %0 = arith.cmpi eq, %arg0, %c0_i32 : i32
    %1 = arith.extui %0 : i1 to i32
    %c0_i32_0 = arith.constant 0 : i32
    %2 = arith.cmpi ne, %1, %c0_i32_0 : i32
    scf.if %2 {
      %cst_74 = arith.constant 0.000000e+00 : f32
      %266 = vector.broadcast %cst_74 : f32 to vector<2x32xf32>
      %c0_75 = arith.constant 0 : index
      %c0_76 = arith.constant 0 : index
      %267 = vector.load %arg6[%c0_75, %c0_76] : memref<2x32xf32, #tpu.memory_space<vmem>>, vector<2x32xf32>
      tpu.vector_store %arg6[%c0_75, %c0_76], %266 {strides = array<i32>} : memref<2x32xf32, #tpu.memory_space<vmem>>, vector<2x32xf32>,
      %cst_77 = arith.constant 0.000000e+00 : f32
      %268 = vector.broadcast %cst_77 : f32 to vector<2x32xf32>
      %c0_78 = arith.constant 0 : index
      %c0_79 = arith.constant 0 : index
      %269 = vector.load %arg7[%c0_78, %c0_79] : memref<2x32xf32, #tpu.memory_space<vmem>>, vector<2x32xf32>
      tpu.vector_store %arg7[%c0_78, %c0_79], %268 {strides = array<i32>} : memref<2x32xf32, #tpu.memory_space<vmem>>, vector<2x32xf32>,
    } else {
    }
    %c0 = arith.constant 0 : index
    %c0_1 = arith.constant 0 : index
    %3 = vector.load %arg6[%c0, %c0_1] : memref<2x32xf32, #tpu.memory_space<vmem>>, vector<2x32xf32>
    %c0_2 = arith.constant 0 : index
    %c0_3 = arith.constant 0 : index
    %4 = vector.load %arg7[%c0_2, %c0_3] : memref<2x32xf32, #tpu.memory_space<vmem>>, vector<2x32xf32>
    %c0_i32_4 = arith.constant 0 : i32
    %5 = arith.index_cast %c0_i32_4 : i32 to index
    %c0_5 = arith.constant 0 : index
    %c0_6 = arith.constant 0 : index
    %6 = vector.load %arg1[%5, %c0_5, %c0_6] : memref<8x2x128xf32, #tpu.memory_space<vmem>>, vector<1x2x128xf32>
    %7 = vector.shape_cast %6 : vector<1x2x128xf32> to vector<2x128xf32>
    %8 = arith.truncf %3 : vector<2x32xf32> to vector<2x32xbf16>
    %c0_7 = arith.constant 0 : index
    %c0_8 = arith.constant 0 : index
    %9 = vector.load %arg2[%c0_7, %c0_8] : memref<32x128xbf16, #tpu.memory_space<vmem>>, vector<32x128xbf16>
    %cst = arith.constant dense<0.000000e+00> : vector<2x128xf32>
    %10 = tpu.matmul %8, %9, %cst {dimension_numbers = #tpu.dot_dimension_numbers<[1], [0], [0], [1], [0, 0, 1, 1], [], []>} : vector<2x32xbf16>, vector<32x128xbf16>, vector<2x128xf32> -> vector<2x128xf32>
    %11 = arith.addf %7, %10 : vector<2x128xf32>
    %12 = vector.extract_strided_slice %11 {offsets = [0, 0], sizes = [2, 32], strides = [1, 1]} : vector<2x128xf32> to vector<2x32xf32>
    %13 = arith.negf %12 : vector<2x32xf32>
    %14 = math.exp %13 : vector<2x32xf32>
    %cst_9 = arith.constant 1.000000e+00 : f32
    %15 = vector.broadcast %cst_9 : f32 to vector<2x32xf32>
    %16 = arith.addf %15, %14 : vector<2x32xf32>
    %17 = arith.divf %15, %16 : vector<2x32xf32>
    %18 = vector.extract_strided_slice %11 {offsets = [0, 32], sizes = [2, 32], strides = [1, 1]} : vector<2x128xf32> to vector<2x32xf32>
    %19 = arith.negf %18 : vector<2x32xf32>
    %20 = math.exp %19 : vector<2x32xf32>
    %cst_10 = arith.constant 1.000000e+00 : f32
    %21 = vector.broadcast %cst_10 : f32 to vector<2x32xf32>
    %22 = arith.addf %21, %20 : vector<2x32xf32>
    %23 = arith.divf %21, %22 : vector<2x32xf32>
    %24 = vector.extract_strided_slice %11 {offsets = [0, 64], sizes = [2, 32], strides = [1, 1]} : vector<2x128xf32> to vector<2x32xf32>
    %25 = math.tanh %24 : vector<2x32xf32>
    %26 = vector.extract_strided_slice %11 {offsets = [0, 96], sizes = [2, 32], strides = [1, 1]} : vector<2x128xf32> to vector<2x32xf32>
    %27 = arith.negf %26 : vector<2x32xf32>
    %28 = math.exp %27 : vector<2x32xf32>
    %cst_11 = arith.constant 1.000000e+00 : f32
    %29 = vector.broadcast %cst_11 : f32 to vector<2x32xf32>
    %30 = arith.addf %29, %28 : vector<2x32xf32>
    %31 = arith.divf %29, %30 : vector<2x32xf32>
    %32 = arith.mulf %23, %4 : vector<2x32xf32>
    %33 = arith.mulf %17, %25 : vector<2x32xf32>
    %34 = arith.addf %32, %33 : vector<2x32xf32>
    %35 = math.tanh %34 : vector<2x32xf32>
    %36 = arith.mulf %31, %35 : vector<2x32xf32>
    %c1_i32 = arith.constant 1 : i32
    %37 = arith.index_cast %c1_i32 : i32 to index
    %c0_12 = arith.constant 0 : index
    %c0_13 = arith.constant 0 : index
    %38 = vector.load %arg1[%37, %c0_12, %c0_13] : memref<8x2x128xf32, #tpu.memory_space<vmem>>, vector<1x2x128xf32>
    %39 = vector.shape_cast %38 : vector<1x2x128xf32> to vector<2x128xf32>
    %40 = arith.truncf %36 : vector<2x32xf32> to vector<2x32xbf16>
    %c0_14 = arith.constant 0 : index
    %c0_15 = arith.constant 0 : index
    %41 = vector.load %arg2[%c0_14, %c0_15] : memref<32x128xbf16, #tpu.memory_space<vmem>>, vector<32x128xbf16>
    %cst_16 = arith.constant dense<0.000000e+00> : vector<2x128xf32>
    %42 = tpu.matmul %40, %41, %cst_16 {dimension_numbers = #tpu.dot_dimension_numbers<[1], [0], [0], [1], [0, 0, 1, 1], [], []>} : vector<2x32xbf16>, vector<32x128xbf16>, vector<2x128xf32> -> vector<2x128xf32>
    %43 = arith.addf %39, %42 : vector<2x128xf32>
    %44 = vector.extract_strided_slice %43 {offsets = [0, 0], sizes = [2, 32], strides = [1, 1]} : vector<2x128xf32> to vector<2x32xf32>
    %45 = arith.negf %44 : vector<2x32xf32>
    %46 = math.exp %45 : vector<2x32xf32>
    %cst_17 = arith.constant 1.000000e+00 : f32
    %47 = vector.broadcast %cst_17 : f32 to vector<2x32xf32>
    %48 = arith.addf %47, %46 : vector<2x32xf32>
    %49 = arith.divf %47, %48 : vector<2x32xf32>
    %50 = vector.extract_strided_slice %43 {offsets = [0, 32], sizes = [2, 32], strides = [1, 1]} : vector<2x128xf32> to vector<2x32xf32>
    %51 = arith.negf %50 : vector<2x32xf32>
    %52 = math.exp %51 : vector<2x32xf32>
    %cst_18 = arith.constant 1.000000e+00 : f32
    %53 = vector.broadcast %cst_18 : f32 to vector<2x32xf32>
    %54 = arith.addf %53, %52 : vector<2x32xf32>
    %55 = arith.divf %53, %54 : vector<2x32xf32>
    %56 = vector.extract_strided_slice %43 {offsets = [0, 64], sizes = [2, 32], strides = [1, 1]} : vector<2x128xf32> to vector<2x32xf32>
    %57 = math.tanh %56 : vector<2x32xf32>
    %58 = vector.extract_strided_slice %43 {offsets = [0, 96], sizes = [2, 32], strides = [1, 1]} : vector<2x128xf32> to vector<2x32xf32>
    %59 = arith.negf %58 : vector<2x32xf32>
    %60 = math.exp %59 : vector<2x32xf32>
    %cst_19 = arith.constant 1.000000e+00 : f32
    %61 = vector.broadcast %cst_19 : f32 to vector<2x32xf32>
    %62 = arith.addf %61, %60 : vector<2x32xf32>
    %63 = arith.divf %61, %62 : vector<2x32xf32>
    %64 = arith.mulf %55, %34 : vector<2x32xf32>
    %65 = arith.mulf %49, %57 : vector<2x32xf32>
    %66 = arith.addf %64, %65 : vector<2x32xf32>
    %67 = math.tanh %66 : vector<2x32xf32>
    %68 = arith.mulf %63, %67 : vector<2x32xf32>
    %c2_i32 = arith.constant 2 : i32
    %69 = arith.index_cast %c2_i32 : i32 to index
    %c0_20 = arith.constant 0 : index
    %c0_21 = arith.constant 0 : index
    %70 = vector.load %arg1[%69, %c0_20, %c0_21] : memref<8x2x128xf32, #tpu.memory_space<vmem>>, vector<1x2x128xf32>
    %71 = vector.shape_cast %70 : vector<1x2x128xf32> to vector<2x128xf32>
    %72 = arith.truncf %68 : vector<2x32xf32> to vector<2x32xbf16>
    %c0_22 = arith.constant 0 : index
    %c0_23 = arith.constant 0 : index
    %73 = vector.load %arg2[%c0_22, %c0_23] : memref<32x128xbf16, #tpu.memory_space<vmem>>, vector<32x128xbf16>
    %cst_24 = arith.constant dense<0.000000e+00> : vector<2x128xf32>
    %74 = tpu.matmul %72, %73, %cst_24 {dimension_numbers = #tpu.dot_dimension_numbers<[1], [0], [0], [1], [0, 0, 1, 1], [], []>} : vector<2x32xbf16>, vector<32x128xbf16>, vector<2x128xf32> -> vector<2x128xf32>
    %75 = arith.addf %71, %74 : vector<2x128xf32>
    %76 = vector.extract_strided_slice %75 {offsets = [0, 0], sizes = [2, 32], strides = [1, 1]} : vector<2x128xf32> to vector<2x32xf32>
    %77 = arith.negf %76 : vector<2x32xf32>
    %78 = math.exp %77 : vector<2x32xf32>
    %cst_25 = arith.constant 1.000000e+00 : f32
    %79 = vector.broadcast %cst_25 : f32 to vector<2x32xf32>
    %80 = arith.addf %79, %78 : vector<2x32xf32>
    %81 = arith.divf %79, %80 : vector<2x32xf32>
    %82 = vector.extract_strided_slice %75 {offsets = [0, 32], sizes = [2, 32], strides = [1, 1]} : vector<2x128xf32> to vector<2x32xf32>
    %83 = arith.negf %82 : vector<2x32xf32>
    %84 = math.exp %83 : vector<2x32xf32>
    %cst_26 = arith.constant 1.000000e+00 : f32
    %85 = vector.broadcast %cst_26 : f32 to vector<2x32xf32>
    %86 = arith.addf %85, %84 : vector<2x32xf32>
    %87 = arith.divf %85, %86 : vector<2x32xf32>
    %88 = vector.extract_strided_slice %75 {offsets = [0, 64], sizes = [2, 32], strides = [1, 1]} : vector<2x128xf32> to vector<2x32xf32>
    %89 = math.tanh %88 : vector<2x32xf32>
    %90 = vector.extract_strided_slice %75 {offsets = [0, 96], sizes = [2, 32], strides = [1, 1]} : vector<2x128xf32> to vector<2x32xf32>
    %91 = arith.negf %90 : vector<2x32xf32>
    %92 = math.exp %91 : vector<2x32xf32>
    %cst_27 = arith.constant 1.000000e+00 : f32
    %93 = vector.broadcast %cst_27 : f32 to vector<2x32xf32>
    %94 = arith.addf %93, %92 : vector<2x32xf32>
    %95 = arith.divf %93, %94 : vector<2x32xf32>
    %96 = arith.mulf %87, %66 : vector<2x32xf32>
    %97 = arith.mulf %81, %89 : vector<2x32xf32>
    %98 = arith.addf %96, %97 : vector<2x32xf32>
    %99 = math.tanh %98 : vector<2x32xf32>
    %100 = arith.mulf %95, %99 : vector<2x32xf32>
    %c3_i32 = arith.constant 3 : i32
    %101 = arith.index_cast %c3_i32 : i32 to index
    %c0_28 = arith.constant 0 : index
    %c0_29 = arith.constant 0 : index
    %102 = vector.load %arg1[%101, %c0_28, %c0_29] : memref<8x2x128xf32, #tpu.memory_space<vmem>>, vector<1x2x128xf32>
    %103 = vector.shape_cast %102 : vector<1x2x128xf32> to vector<2x128xf32>
    %104 = arith.truncf %100 : vector<2x32xf32> to vector<2x32xbf16>
    %c0_30 = arith.constant 0 : index
    %c0_31 = arith.constant 0 : index
    %105 = vector.load %arg2[%c0_30, %c0_31] : memref<32x128xbf16, #tpu.memory_space<vmem>>, vector<32x128xbf16>
    %cst_32 = arith.constant dense<0.000000e+00> : vector<2x128xf32>
    %106 = tpu.matmul %104, %105, %cst_32 {dimension_numbers = #tpu.dot_dimension_numbers<[1], [0], [0], [1], [0, 0, 1, 1], [], []>} : vector<2x32xbf16>, vector<32x128xbf16>, vector<2x128xf32> -> vector<2x128xf32>
    %107 = arith.addf %103, %106 : vector<2x128xf32>
    %108 = vector.extract_strided_slice %107 {offsets = [0, 0], sizes = [2, 32], strides = [1, 1]} : vector<2x128xf32> to vector<2x32xf32>
    %109 = arith.negf %108 : vector<2x32xf32>
    %110 = math.exp %109 : vector<2x32xf32>
    %cst_33 = arith.constant 1.000000e+00 : f32
    %111 = vector.broadcast %cst_33 : f32 to vector<2x32xf32>
    %112 = arith.addf %111, %110 : vector<2x32xf32>
    %113 = arith.divf %111, %112 : vector<2x32xf32>
    %114 = vector.extract_strided_slice %107 {offsets = [0, 32], sizes = [2, 32], strides = [1, 1]} : vector<2x128xf32> to vector<2x32xf32>
    %115 = arith.negf %114 : vector<2x32xf32>
    %116 = math.exp %115 : vector<2x32xf32>
    %cst_34 = arith.constant 1.000000e+00 : f32
    %117 = vector.broadcast %cst_34 : f32 to vector<2x32xf32>
    %118 = arith.addf %117, %116 : vector<2x32xf32>
    %119 = arith.divf %117, %118 : vector<2x32xf32>
    %120 = vector.extract_strided_slice %107 {offsets = [0, 64], sizes = [2, 32], strides = [1, 1]} : vector<2x128xf32> to vector<2x32xf32>
    %121 = math.tanh %120 : vector<2x32xf32>
    %122 = vector.extract_strided_slice %107 {offsets = [0, 96], sizes = [2, 32], strides = [1, 1]} : vector<2x128xf32> to vector<2x32xf32>
    %123 = arith.negf %122 : vector<2x32xf32>
    %124 = math.exp %123 : vector<2x32xf32>
    %cst_35 = arith.constant 1.000000e+00 : f32
    %125 = vector.broadcast %cst_35 : f32 to vector<2x32xf32>
    %126 = arith.addf %125, %124 : vector<2x32xf32>
    %127 = arith.divf %125, %126 : vector<2x32xf32>
    %128 = arith.mulf %119, %98 : vector<2x32xf32>
    %129 = arith.mulf %113, %121 : vector<2x32xf32>
    %130 = arith.addf %128, %129 : vector<2x32xf32>
    %131 = math.tanh %130 : vector<2x32xf32>
    %132 = arith.mulf %127, %131 : vector<2x32xf32>
    %c4_i32 = arith.constant 4 : i32
    %133 = arith.index_cast %c4_i32 : i32 to index
    %c0_36 = arith.constant 0 : index
    %c0_37 = arith.constant 0 : index
    %134 = vector.load %arg1[%133, %c0_36, %c0_37] : memref<8x2x128xf32, #tpu.memory_space<vmem>>, vector<1x2x128xf32>
    %135 = vector.shape_cast %134 : vector<1x2x128xf32> to vector<2x128xf32>
    %136 = arith.truncf %132 : vector<2x32xf32> to vector<2x32xbf16>
    %c0_38 = arith.constant 0 : index
    %c0_39 = arith.constant 0 : index
    %137 = vector.load %arg2[%c0_38, %c0_39] : memref<32x128xbf16, #tpu.memory_space<vmem>>, vector<32x128xbf16>
    %cst_40 = arith.constant dense<0.000000e+00> : vector<2x128xf32>
    %138 = tpu.matmul %136, %137, %cst_40 {dimension_numbers = #tpu.dot_dimension_numbers<[1], [0], [0], [1], [0, 0, 1, 1], [], []>} : vector<2x32xbf16>, vector<32x128xbf16>, vector<2x128xf32> -> vector<2x128xf32>
    %139 = arith.addf %135, %138 : vector<2x128xf32>
    %140 = vector.extract_strided_slice %139 {offsets = [0, 0], sizes = [2, 32], strides = [1, 1]} : vector<2x128xf32> to vector<2x32xf32>
    %141 = arith.negf %140 : vector<2x32xf32>
    %142 = math.exp %141 : vector<2x32xf32>
    %cst_41 = arith.constant 1.000000e+00 : f32
    %143 = vector.broadcast %cst_41 : f32 to vector<2x32xf32>
    %144 = arith.addf %143, %142 : vector<2x32xf32>
    %145 = arith.divf %143, %144 : vector<2x32xf32>
    %146 = vector.extract_strided_slice %139 {offsets = [0, 32], sizes = [2, 32], strides = [1, 1]} : vector<2x128xf32> to vector<2x32xf32>
    %147 = arith.negf %146 : vector<2x32xf32>
    %148 = math.exp %147 : vector<2x32xf32>
    %cst_42 = arith.constant 1.000000e+00 : f32
    %149 = vector.broadcast %cst_42 : f32 to vector<2x32xf32>
    %150 = arith.addf %149, %148 : vector<2x32xf32>
    %151 = arith.divf %149, %150 : vector<2x32xf32>
    %152 = vector.extract_strided_slice %139 {offsets = [0, 64], sizes = [2, 32], strides = [1, 1]} : vector<2x128xf32> to vector<2x32xf32>
    %153 = math.tanh %152 : vector<2x32xf32>
    %154 = vector.extract_strided_slice %139 {offsets = [0, 96], sizes = [2, 32], strides = [1, 1]} : vector<2x128xf32> to vector<2x32xf32>
    %155 = arith.negf %154 : vector<2x32xf32>
    %156 = math.exp %155 : vector<2x32xf32>
    %cst_43 = arith.constant 1.000000e+00 : f32
    %157 = vector.broadcast %cst_43 : f32 to vector<2x32xf32>
    %158 = arith.addf %157, %156 : vector<2x32xf32>
    %159 = arith.divf %157, %158 : vector<2x32xf32>
    %160 = arith.mulf %151, %130 : vector<2x32xf32>
    %161 = arith.mulf %145, %153 : vector<2x32xf32>
    %162 = arith.addf %160, %161 : vector<2x32xf32>
    %163 = math.tanh %162 : vector<2x32xf32>
    %164 = arith.mulf %159, %163 : vector<2x32xf32>
    %c5_i32 = arith.constant 5 : i32
    %165 = arith.index_cast %c5_i32 : i32 to index
    %c0_44 = arith.constant 0 : index
    %c0_45 = arith.constant 0 : index
    %166 = vector.load %arg1[%165, %c0_44, %c0_45] : memref<8x2x128xf32, #tpu.memory_space<vmem>>, vector<1x2x128xf32>
    %167 = vector.shape_cast %166 : vector<1x2x128xf32> to vector<2x128xf32>
    %168 = arith.truncf %164 : vector<2x32xf32> to vector<2x32xbf16>
    %c0_46 = arith.constant 0 : index
    %c0_47 = arith.constant 0 : index
    %169 = vector.load %arg2[%c0_46, %c0_47] : memref<32x128xbf16, #tpu.memory_space<vmem>>, vector<32x128xbf16>
    %cst_48 = arith.constant dense<0.000000e+00> : vector<2x128xf32>
    %170 = tpu.matmul %168, %169, %cst_48 {dimension_numbers = #tpu.dot_dimension_numbers<[1], [0], [0], [1], [0, 0, 1, 1], [], []>} : vector<2x32xbf16>, vector<32x128xbf16>, vector<2x128xf32> -> vector<2x128xf32>
    %171 = arith.addf %167, %170 : vector<2x128xf32>
    %172 = vector.extract_strided_slice %171 {offsets = [0, 0], sizes = [2, 32], strides = [1, 1]} : vector<2x128xf32> to vector<2x32xf32>
    %173 = arith.negf %172 : vector<2x32xf32>
    %174 = math.exp %173 : vector<2x32xf32>
    %cst_49 = arith.constant 1.000000e+00 : f32
    %175 = vector.broadcast %cst_49 : f32 to vector<2x32xf32>
    %176 = arith.addf %175, %174 : vector<2x32xf32>
    %177 = arith.divf %175, %176 : vector<2x32xf32>
    %178 = vector.extract_strided_slice %171 {offsets = [0, 32], sizes = [2, 32], strides = [1, 1]} : vector<2x128xf32> to vector<2x32xf32>
    %179 = arith.negf %178 : vector<2x32xf32>
    %180 = math.exp %179 : vector<2x32xf32>
    %cst_50 = arith.constant 1.000000e+00 : f32
    %181 = vector.broadcast %cst_50 : f32 to vector<2x32xf32>
    %182 = arith.addf %181, %180 : vector<2x32xf32>
    %183 = arith.divf %181, %182 : vector<2x32xf32>
    %184 = vector.extract_strided_slice %171 {offsets = [0, 64], sizes = [2, 32], strides = [1, 1]} : vector<2x128xf32> to vector<2x32xf32>
    %185 = math.tanh %184 : vector<2x32xf32>
    %186 = vector.extract_strided_slice %171 {offsets = [0, 96], sizes = [2, 32], strides = [1, 1]} : vector<2x128xf32> to vector<2x32xf32>
    %187 = arith.negf %186 : vector<2x32xf32>
    %188 = math.exp %187 : vector<2x32xf32>
    %cst_51 = arith.constant 1.000000e+00 : f32
    %189 = vector.broadcast %cst_51 : f32 to vector<2x32xf32>
    %190 = arith.addf %189, %188 : vector<2x32xf32>
    %191 = arith.divf %189, %190 : vector<2x32xf32>
    %192 = arith.mulf %183, %162 : vector<2x32xf32>
    %193 = arith.mulf %177, %185 : vector<2x32xf32>
    %194 = arith.addf %192, %193 : vector<2x32xf32>
    %195 = math.tanh %194 : vector<2x32xf32>
    %196 = arith.mulf %191, %195 : vector<2x32xf32>
    %c6_i32 = arith.constant 6 : i32
    %197 = arith.index_cast %c6_i32 : i32 to index
    %c0_52 = arith.constant 0 : index
    %c0_53 = arith.constant 0 : index
    %198 = vector.load %arg1[%197, %c0_52, %c0_53] : memref<8x2x128xf32, #tpu.memory_space<vmem>>, vector<1x2x128xf32>
    %199 = vector.shape_cast %198 : vector<1x2x128xf32> to vector<2x128xf32>
    %200 = arith.truncf %196 : vector<2x32xf32> to vector<2x32xbf16>
    %c0_54 = arith.constant 0 : index
    %c0_55 = arith.constant 0 : index
    %201 = vector.load %arg2[%c0_54, %c0_55] : memref<32x128xbf16, #tpu.memory_space<vmem>>, vector<32x128xbf16>
    %cst_56 = arith.constant dense<0.000000e+00> : vector<2x128xf32>
    %202 = tpu.matmul %200, %201, %cst_56 {dimension_numbers = #tpu.dot_dimension_numbers<[1], [0], [0], [1], [0, 0, 1, 1], [], []>} : vector<2x32xbf16>, vector<32x128xbf16>, vector<2x128xf32> -> vector<2x128xf32>
    %203 = arith.addf %199, %202 : vector<2x128xf32>
    %204 = vector.extract_strided_slice %203 {offsets = [0, 0], sizes = [2, 32], strides = [1, 1]} : vector<2x128xf32> to vector<2x32xf32>
    %205 = arith.negf %204 : vector<2x32xf32>
    %206 = math.exp %205 : vector<2x32xf32>
    %cst_57 = arith.constant 1.000000e+00 : f32
    %207 = vector.broadcast %cst_57 : f32 to vector<2x32xf32>
    %208 = arith.addf %207, %206 : vector<2x32xf32>
    %209 = arith.divf %207, %208 : vector<2x32xf32>
    %210 = vector.extract_strided_slice %203 {offsets = [0, 32], sizes = [2, 32], strides = [1, 1]} : vector<2x128xf32> to vector<2x32xf32>
    %211 = arith.negf %210 : vector<2x32xf32>
    %212 = math.exp %211 : vector<2x32xf32>
    %cst_58 = arith.constant 1.000000e+00 : f32
    %213 = vector.broadcast %cst_58 : f32 to vector<2x32xf32>
    %214 = arith.addf %213, %212 : vector<2x32xf32>
    %215 = arith.divf %213, %214 : vector<2x32xf32>
    %216 = vector.extract_strided_slice %203 {offsets = [0, 64], sizes = [2, 32], strides = [1, 1]} : vector<2x128xf32> to vector<2x32xf32>
    %217 = math.tanh %216 : vector<2x32xf32>
    %218 = vector.extract_strided_slice %203 {offsets = [0, 96], sizes = [2, 32], strides = [1, 1]} : vector<2x128xf32> to vector<2x32xf32>
    %219 = arith.negf %218 : vector<2x32xf32>
    %220 = math.exp %219 : vector<2x32xf32>
    %cst_59 = arith.constant 1.000000e+00 : f32
    %221 = vector.broadcast %cst_59 : f32 to vector<2x32xf32>
    %222 = arith.addf %221, %220 : vector<2x32xf32>
    %223 = arith.divf %221, %222 : vector<2x32xf32>
    %224 = arith.mulf %215, %194 : vector<2x32xf32>
    %225 = arith.mulf %209, %217 : vector<2x32xf32>
    %226 = arith.addf %224, %225 : vector<2x32xf32>
    %227 = math.tanh %226 : vector<2x32xf32>
    %228 = arith.mulf %223, %227 : vector<2x32xf32>
    %c7_i32 = arith.constant 7 : i32
    %229 = arith.index_cast %c7_i32 : i32 to index
    %c0_60 = arith.constant 0 : index
    %c0_61 = arith.constant 0 : index
    %230 = vector.load %arg1[%229, %c0_60, %c0_61] : memref<8x2x128xf32, #tpu.memory_space<vmem>>, vector<1x2x128xf32>
    %231 = vector.shape_cast %230 : vector<1x2x128xf32> to vector<2x128xf32>
    %232 = arith.truncf %228 : vector<2x32xf32> to vector<2x32xbf16>
    %c0_62 = arith.constant 0 : index
    %c0_63 = arith.constant 0 : index
    %233 = vector.load %arg2[%c0_62, %c0_63] : memref<32x128xbf16, #tpu.memory_space<vmem>>, vector<32x128xbf16>
    %cst_64 = arith.constant dense<0.000000e+00> : vector<2x128xf32>
    %234 = tpu.matmul %232, %233, %cst_64 {dimension_numbers = #tpu.dot_dimension_numbers<[1], [0], [0], [1], [0, 0, 1, 1], [], []>} : vector<2x32xbf16>, vector<32x128xbf16>, vector<2x128xf32> -> vector<2x128xf32>
    %235 = arith.addf %231, %234 : vector<2x128xf32>
    %236 = vector.extract_strided_slice %235 {offsets = [0, 0], sizes = [2, 32], strides = [1, 1]} : vector<2x128xf32> to vector<2x32xf32>
    %237 = arith.negf %236 : vector<2x32xf32>
    %238 = math.exp %237 : vector<2x32xf32>
    %cst_65 = arith.constant 1.000000e+00 : f32
    %239 = vector.broadcast %cst_65 : f32 to vector<2x32xf32>
    %240 = arith.addf %239, %238 : vector<2x32xf32>
    %241 = arith.divf %239, %240 : vector<2x32xf32>
    %242 = vector.extract_strided_slice %235 {offsets = [0, 32], sizes = [2, 32], strides = [1, 1]} : vector<2x128xf32> to vector<2x32xf32>
    %243 = arith.negf %242 : vector<2x32xf32>
    %244 = math.exp %243 : vector<2x32xf32>
    %cst_66 = arith.constant 1.000000e+00 : f32
    %245 = vector.broadcast %cst_66 : f32 to vector<2x32xf32>
    %246 = arith.addf %245, %244 : vector<2x32xf32>
    %247 = arith.divf %245, %246 : vector<2x32xf32>
    %248 = vector.extract_strided_slice %235 {offsets = [0, 64], sizes = [2, 32], strides = [1, 1]} : vector<2x128xf32> to vector<2x32xf32>
    %249 = math.tanh %248 : vector<2x32xf32>
    %250 = vector.extract_strided_slice %235 {offsets = [0, 96], sizes = [2, 32], strides = [1, 1]} : vector<2x128xf32> to vector<2x32xf32>
    %251 = arith.negf %250 : vector<2x32xf32>
    %252 = math.exp %251 : vector<2x32xf32>
    %cst_67 = arith.constant 1.000000e+00 : f32
    %253 = vector.broadcast %cst_67 : f32 to vector<2x32xf32>
    %254 = arith.addf %253, %252 : vector<2x32xf32>
    %255 = arith.divf %253, %254 : vector<2x32xf32>
    %256 = arith.mulf %247, %226 : vector<2x32xf32>
    %257 = arith.mulf %241, %249 : vector<2x32xf32>
    %258 = arith.addf %256, %257 : vector<2x32xf32>
    %259 = math.tanh %258 : vector<2x32xf32>
    %260 = arith.mulf %255, %259 : vector<2x32xf32>
    %c8_i32 = arith.constant 8 : i32
    %c0_68 = arith.constant 0 : index
    %c0_69 = arith.constant 0 : index
    %261 = vector.load %arg6[%c0_68, %c0_69] : memref<2x32xf32, #tpu.memory_space<vmem>>, vector<2x32xf32>
    tpu.vector_store %arg6[%c0_68, %c0_69], %260 {strides = array<i32>} : memref<2x32xf32, #tpu.memory_space<vmem>>, vector<2x32xf32>,
    %c0_70 = arith.constant 0 : index
    %c0_71 = arith.constant 0 : index
    %262 = vector.load %arg7[%c0_70, %c0_71] : memref<2x32xf32, #tpu.memory_space<vmem>>, vector<2x32xf32>
    tpu.vector_store %arg7[%c0_70, %c0_71], %258 {strides = array<i32>} : memref<2x32xf32, #tpu.memory_space<vmem>>, vector<2x32xf32>,
    %c0_i32_72 = arith.constant 0 : i32
    %263 = arith.cmpi eq, %arg0, %c0_i32_72 : i32
    %264 = arith.extui %263 : i1 to i32
    %c0_i32_73 = arith.constant 0 : i32
    %265 = arith.cmpi ne, %264, %c0_i32_73 : i32
    scf.if %265 {
      %266 = arith.truncf %260 : vector<2x32xf32> to vector<2x32xbf16>
      %c0_74 = arith.constant 0 : index
      %c0_75 = arith.constant 0 : index
      %267 = vector.load %arg3[%c0_74, %c0_75] : memref<32x8xbf16, #tpu.memory_space<vmem>>, vector<32x8xbf16>
      %cst_76 = arith.constant dense<0.000000e+00> : vector<2x8xf32>
      %268 = tpu.matmul %266, %267, %cst_76 {dimension_numbers = #tpu.dot_dimension_numbers<[1], [0], [0], [1], [0, 0, 1, 1], [], []>} : vector<2x32xbf16>, vector<32x8xbf16>, vector<2x8xf32> -> vector<2x8xf32>
      %c0_77 = arith.constant 0 : index
      %c0_78 = arith.constant 0 : index
      %269 = vector.load %arg4[%c0_77, %c0_78] : memref<1x8xf32, #tpu.memory_space<vmem>>, vector<1x8xf32>
      %270 = vector.broadcast %269 : vector<1x8xf32> to vector<2x8xf32>
      %271 = arith.addf %268, %270 : vector<2x8xf32>
      %c0_79 = arith.constant 0 : index
      %c0_80 = arith.constant 0 : index
      %272 = vector.load %arg5[%c0_79, %c0_80] : memref<2x8xf32, #tpu.memory_space<vmem>>, vector<2x8xf32>
      tpu.vector_store %arg5[%c0_79, %c0_80], %271 {strides = array<i32>} : memref<2x8xf32, #tpu.memory_space<vmem>>, vector<2x8xf32>,
    } else {
    }
    return
  }
  func.func @transform_0(%arg0: i32) -> (i32, i32, i32) {
    %c0_i32 = arith.constant 0 : i32
    %c0_i32_0 = arith.constant 0 : i32
    %c0_i32_1 = arith.constant 0 : i32
    return %arg0, %c0_i32, %c0_i32_0 : i32, i32, i32
  }
  func.func @transform_1(%arg0: i32) -> (i32, i32) {
    %c0_i32 = arith.constant 0 : i32
    %c0_i32_0 = arith.constant 0 : i32
    %c0_i32_1 = arith.constant 0 : i32
    return %c0_i32, %c0_i32_0 : i32, i32
  }
  func.func @transform_2(%arg0: i32) -> (i32, i32) {
    %c0_i32 = arith.constant 0 : i32
    %c0_i32_0 = arith.constant 0 : i32
    %c0_i32_1 = arith.constant 0 : i32
    return %c0_i32, %c0_i32_0 : i32, i32
  }
  func.func @transform_3(%arg0: i32) -> (i32, i32) {
    %c0_i32 = arith.constant 0 : i32
    %c0_i32_0 = arith.constant 0 : i32
    %c0_i32_1 = arith.constant 0 : i32
    return %c0_i32, %c0_i32_0 : i32, i32
  }
  func.func @transform_4(%arg0: i32) -> (i32, i32) {
    %c0_i32 = arith.constant 0 : i32
    %c0_i32_0 = arith.constant 0 : i32
    %c0_i32_1 = arith.constant 0 : i32
    return %c0_i32, %c0_i32_0 : i32, i32
  }
}

</mosaic_0001>

<llo_original>
// kernel: tpu_custom_call.1
$region0: #{tpu_custom_call.1}
  #allocation0 [shape = 'u32[]', space=smem, size = 0x4, offset = 0x4, fixed_abs, tag = 'smem constant byte address 0x4 - core index']
  #allocation1 [shape = 'u32[144,128]{1,0:T(1,128)}', space=vmem, size = 0x12000, scoped, tag = 'internal scratch']
  #allocation2 [shape = 'f32[2,32]{1,0:T(2,128)}', space=vmem, size = 0x400, scoped, tag = 'scratch operand']
  #allocation3 [shape = 'f32[2,32]{1,0:T(2,128)}', space=vmem, size = 0x400, scoped, tag = 'scratch operand']
  %s0 = inlined_call_operand.vmem [shape: f32[8,2,128], index: 0, kind: input, shape index: {}]
  %s1 = inlined_call_operand.hbm [shape: bf16[32,128], index: 1, kind: input, shape index: {}]
  %s2 = inlined_call_operand.vmem [shape: bf16[32,8], index: 2, kind: input, shape index: {}]
  %s3 = inlined_call_operand.vmem [shape: f32[1,8], index: 3, kind: input, shape index: {}]
  %s4 = inlined_call_operand.hbm [shape: f32[2,8], index: 4, kind: output, shape index: {}]
  %s5 = sld [smem:[#allocation0]]
  $region38: #{tpu_custom_call.1} parent=0
    _
  %s7 = ssub.s32 1, %s5
  %s8 = scalar_select 0, %s7, %s5
  $region1: #{tpu_custom_call.1} parent=0
    #allocation4 [shape = 'u8[8192]{0}', space=vmem, size = 0x2000, scoped, tag = 'input window, operand 1, single buffered']
    #allocation5 [shape = 's32[1]{0}', space=sflag, size = 0x4, scoped, tag = 'scoped memory for tpu_custom_call.1']
    #allocation6 [shape = 's32[1]{0}', space=sflag, size = 0x4, scoped, tag = 'scoped memory for tpu_custom_call.1']
    #allocation7 [shape = 'u8[1024]{0}', space=vmem, size = 0x400, scoped, tag = 'output window, operand 0, single buffered']
    %9 = vsyncpa [#allocation5], 0
    %10 = vsyncpa [#allocation6], 0
    // Predicated region
    $region2: #{tpu_custom_call.1} parent=1 // pred_check
      _
    $region3: #{tpu_custom_call.1} parent=1 // pred_check_branch
      %12 = sbr.rel (0) target = $region5
    $region4: #{tpu_custom_call.1} parent=1 // pred_region
      _
    $region5: #{tpu_custom_call.1} parent=1 // pred_fallthru
      _
    // Predicated region
    $region6: #{tpu_custom_call.1} parent=1 // pred_check
      _
    $region7: #{tpu_custom_call.1} parent=1 // pred_check_branch
      %14 = sbr.rel (0) target = $region9
    $region8: #{tpu_custom_call.1} parent=1 // pred_region
      %s16 = ssub.s32 256, 256
      %17 = vsyncadd [#allocation5], %s16
      %s18 = sshll.u32 [#allocation4], 4
      %s19 = int_to_ptr.vmem [resolvable:$true] %s18
      %24 = dma.hbm_to_vmem [thread:$0]  %s1, 256, %s19, [#allocation5], 64, 64, 4
    $region9: #{tpu_custom_call.1} parent=1 // pred_fallthru
      _
    // Predicated region
    $region10: #{tpu_custom_call.1} parent=1 // pred_check
      _
    $region11: #{tpu_custom_call.1} parent=1 // pred_check_branch
      %26 = sbr.rel (0) target = $region13
    $region12: #{tpu_custom_call.1} parent=1 // pred_region
      _
    $region13: #{tpu_custom_call.1} parent=1 // pred_fallthru
      _
    // Predicated region
    $region14: #{tpu_custom_call.1} parent=1 // pred_check
      _
    $region15: #{tpu_custom_call.1} parent=1 // pred_check_branch
      %28 = sbr.rel (0) target = $region17
    $region16: #{tpu_custom_call.1} parent=1 // pred_region
      _
    $region17: #{tpu_custom_call.1} parent=1 // pred_fallthru
      _
    // Predicated region
    $region18: #{tpu_custom_call.1} parent=1 // pred_check
      _
    $region19: #{tpu_custom_call.1} parent=1 // pred_check_branch
      %30 = sbr.rel (0) target = $region21
    $region20: #{tpu_custom_call.1} parent=1 // pred_region
      %31 = dma.done [#allocation5], 256
    $region21: #{tpu_custom_call.1} parent=1 // pred_fallthru
      _
    %p33 = scmp.eq.s32.totalorder 0, 0
    // Predicated region
    $region22: #{tpu_custom_call.1} parent=1 // pred_check
      %p34 = pneg %p33
    $region23: #{tpu_custom_call.1} parent=1 // pred_check_branch
      %36 = sbr.rel (%p34) target = $region25
    $region24: #{tpu_custom_call.1} parent=1 // pred_region
      %vm37 = vcmask 254976
      %38 = vst.msk [vmem:[#allocation2] sm:$0x3] %vm37, 0.0
      %39 = vst.msk [vmem:[#allocation3] sm:$0x3] %vm37, 0.0
    $region25: #{tpu_custom_call.1} parent=1 // pred_fallthru
      _
    %v40 = vld [vmem:[#allocation2] sm:$0x3]
    %v41 = vld [vmem:[#allocation3] sm:$0x3]
    %v42 = vld [vmem:[%s0] sm:$0x3]
    %v43 = vpack.c.bf16 %v40, %v40
    %v44 = vld [vmem:[#allocation4] sm:$0xf]
    %v45 = vld [vmem:[#allocation4 + $0x4] sm:$0xf]
    %v46 = vld [vmem:[#allocation4 + $0x8] sm:$0xf]
    %v47 = vld [vmem:[#allocation4 + $0xc] sm:$0xf]
    %v52 = vunpack.c.l.b16 %v44
    %v53 = vunpack.c.l.b16 %v45
    %v54 = vunpack.c.l.b16 %v46
    %v55 = vunpack.c.l.b16 %v47
    %v56 = vpack.c.b16 %v53, %v52
    %v57 = vpack.c.b16 %v55, %v54
    %vm60 = vcmask 261120
    %v62 = vsel %vm60, %v43, 0
    %64 = vmatprep.subr.bf16.mxu0 0
    %65 = vmatpush1.bf16.msra.mxu0 %v56
    %66 = vmatprep.subr.bf16.mxu0 0
    %67 = vmatpush1.bf16.msra.mxu0 %v57
    %68 = vmatprep.subr.bf16.mxu0 0
    %69 = vmatpush1.bf16.msra.mxu0 0
    %70 = vmatprep.subr.bf16.mxu0 0
    %71 = vmatpush1.bf16.msra.mxu0 0
    %72 = vmatprep.subr.bf16.mxu0 0
    %73 = vmatpush1.bf16.msra.mxu0 0
    %74 = vmatprep.subr.bf16.mxu0 0
    %75 = vmatpush1.bf16.msra.mxu0 0
    %76 = vmatprep.subr.bf16.mxu0 0
    %77 = vmatpush1.bf16.msra.mxu0 0
    %78 = vmatprep.subr.bf16.mxu0 0
    %79 = vmatpush1.bf16.msra.mxu0 0
    %80 = vmatprep.subr.bf16.mxu0 0
    %81 = vmatpush1.bf16.msra.mxu0 0
    %82 = vmatprep.subr.bf16.mxu0 0
    %83 = vmatpush1.bf16.msra.mxu0 0
    %84 = vmatprep.subr.bf16.mxu0 0
    %85 = vmatpush1.bf16.msra.mxu0 0
    %86 = vmatprep.subr.bf16.mxu0 0
    %87 = vmatpush1.bf16.msra.mxu0 0
    %88 = vmatprep.subr.bf16.mxu0 0
    %89 = vmatpush1.bf16.msra.mxu0 0
    %90 = vmatprep.subr.bf16.mxu0 0
    %91 = vmatpush1.bf16.msra.mxu0 0
    %92 = vmatprep.subr.bf16.mxu0 0
    %93 = vmatpush1.bf16.msra.mxu0 0
    %94 = vmatprep.subr.bf16.mxu0 0
    %95 = vmatpush1.bf16.msra.mxu0 0
    %96 = vmatprep.mubr.bf16.mxu0 0
    %97 = vmatmul.mubr.bf16.gmra.mrb[0].mxu0 %v62
    %v98 = vpop.f32.mrb[0].mxu0
    %v99 = vadd.f32 0.0, %v98
    %v100 = vpop.f32.mrb[0].mxu0
    %v101 = vpop.f32.mrb[0].mxu0
    %v102 = vpop.f32.mrb[0].mxu0
    %103 = vdwg.mxu0
    %v104 = vadd.f32 %v42, %v99
    %v105 = vxor.u32 %v104, 2147483648
    %v106 = vmul.f32 %v105, 1.442695
    %v107 = vpow.pop %v106
    %v108 = vadd.f32 %v107, 1.0
    %v109 = vrcp.pop %v108
    %v110 = vmul.f32 1.0, %v109
    %v111 = vtanh.pop %v104
    %113 = vrot.lane.b32.xlu0 %v41, 32
    %v114 = vpop.permute.xlu0 %113
    %v116 = vmul.f32 %v110, %v114
    %118 = vrot.lane.b32.xlu0 %v111, 64
    %v119 = vpop.permute.xlu0 %118
    %v121 = vmul.f32 %v110, %v119
    %123 = vrot.lane.b32.xlu0 %v121, 32
    %v124 = vpop.permute.xlu0 %123
    %v126 = vadd.f32 %v116, %v124
    %v127 = vtanh.pop %v126
    %129 = vrot.lane.b32.xlu0 %v127, 64
    %v130 = vpop.permute.xlu0 %129
    %v132 = vmul.f32 %v110, %v130
    %s133 = scalar_lea.vmem %s0, 2
    %v134 = vld [vmem:[%s133] sm:$0x3]
    %v135 = vpack.c.bf16 %v132, %v132
    %137 = vrot.lane.b32.xlu0 %v135, 32
    %v138 = vpop.permute.xlu0 %137
    %v140 = vsel %vm60, %v138, 0
    %142 = vmatprep.subr.bf16.mxu0 0
    %143 = vmatpush1.bf16.msra.mxu0 %v56
    %144 = vmatprep.subr.bf16.mxu0 0
    %145 = vmatpush1.bf16.msra.mxu0 %v57
    %146 = vmatprep.subr.bf16.mxu0 0
    %147 = vmatpush1.bf16.msra.mxu0 0
    %148 = vmatprep.subr.bf16.mxu0 0
    %149 = vmatpush1.bf16.msra.mxu0 0
    %150 = vmatprep.subr.bf16.mxu0 0
    %151 = vmatpush1.bf16.msra.mxu0 0
    %152 = vmatprep.subr.bf16.mxu0 0
    %153 = vmatpush1.bf16.msra.mxu0 0
    %154 = vmatprep.subr.bf16.mxu0 0
    %155 = vmatpush1.bf16.msra.mxu0 0
    %156 = vmatprep.subr.bf16.mxu0 0
    %157 = vmatpush1.bf16.msra.mxu0 0
    %158 = vmatprep.subr.bf16.mxu0 0
    %159 = vmatpush1.bf16.msra.mxu0 0
    %160 = vmatprep.subr.bf16.mxu0 0
    %161 = vmatpush1.bf16.msra.mxu0 0
    %162 = vmatprep.subr.bf16.mxu0 0
    %163 = vmatpush1.bf16.msra.mxu0 0
    %164 = vmatprep.subr.bf16.mxu0 0
    %165 = vmatpush1.bf16.msra.mxu0 0
    %166 = vmatprep.subr.bf16.mxu0 0
    %167 = vmatpush1.bf16.msra.mxu0 0
    %168 = vmatprep.subr.bf16.mxu0 0
    %169 = vmatpush1.bf16.msra.mxu0 0
    %170 = vmatprep.subr.bf16.mxu0 0
    %171 = vmatpush1.bf16.msra.mxu0 0
    %172 = vmatprep.subr.bf16.mxu0 0
    %173 = vmatpush1.bf16.msra.mxu0 0
    %174 = vmatprep.mubr.bf16.mxu0 0
    %175 = vmatmul.mubr.bf16.gmra.mrb[0].mxu0 %v140
    %v176 = vpop.f32.mrb[0].mxu0
    %v177 = vadd.f32 0.0, %v176
    %v178 = vpop.f32.mrb[0].mxu0
    %v179 = vpop.f32.mrb[0].mxu0
    %v180 = vpop.f32.mrb[0].mxu0
    %181 = vdwg.mxu0
    %v182 = vadd.f32 %v134, %v177
    %v183 = vxor.u32 %v182, 2147483648
    %v184 = vmul.f32 %v183, 1.442695
    %v185 = vpow.pop %v184
    %v186 = vadd.f32 %v185, 1.0
    %v187 = vrcp.pop %v186
    %v188 = vmul.f32 1.0, %v187
    %v189 = vtanh.pop %v182
    %v190 = vmul.f32 %v188, %v126
    %192 = vrot.lane.b32.xlu0 %v189, 64
    %v193 = vpop.permute.xlu0 %192
    %v195 = vmul.f32 %v188, %v193
    %197 = vrot.lane.b32.xlu0 %v195, 32
    %v198 = vpop.permute.xlu0 %197
    %v200 = vadd.f32 %v190, %v198
    %v201 = vtanh.pop %v200
    %203 = vrot.lane.b32.xlu0 %v201, 64
    %v204 = vpop.permute.xlu0 %203
    %v206 = vmul.f32 %v188, %v204
    %s207 = scalar_lea.vmem %s0, 4
    %v208 = vld [vmem:[%s207] sm:$0x3]
    %v209 = vpack.c.bf16 %v206, %v206
    %211 = vrot.lane.b32.xlu0 %v209, 32
    %v212 = vpop.permute.xlu0 %211
    %v214 = vsel %vm60, %v212, 0
    %216 = vmatprep.subr.bf16.mxu0 0
    %217 = vmatpush1.bf16.msra.mxu0 %v56
    %218 = vmatprep.subr.bf16.mxu0 0
    %219 = vmatpush1.bf16.msra.mxu0 %v57
    %220 = vmatprep.subr.bf16.mxu0 0
    %221 = vmatpush1.bf16.msra.mxu0 0
    %222 = vmatprep.subr.bf16.mxu0 0
    %223 = vmatpush1.bf16.msra.mxu0 0
    %224 = vmatprep.subr.bf16.mxu0 0
    %225 = vmatpush1.bf16.msra.mxu0 0
    %226 = vmatprep.subr.bf16.mxu0 0
    %227 = vmatpush1.bf16.msra.mxu0 0
    %228 = vmatprep.subr.bf16.mxu0 0
    %229 = vmatpush1.bf16.msra.mxu0 0
    %230 = vmatprep.subr.bf16.mxu0 0
    %231 = vmatpush1.bf16.msra.mxu0 0
    %232 = vmatprep.subr.bf16.mxu0 0
    %233 = vmatpush1.bf16.msra.mxu0 0
    %234 = vmatprep.subr.bf16.mxu0 0
    %235 = vmatpush1.bf16.msra.mxu0 0
    %236 = vmatprep.subr.bf16.mxu0 0
    %237 = vmatpush1.bf16.msra.mxu0 0
    %238 = vmatprep.subr.bf16.mxu0 0
    %239 = vmatpush1.bf16.msra.mxu0 0
    %240 = vmatprep.subr.bf16.mxu0 0
    %241 = vmatpush1.bf16.msra.mxu0 0
    %242 = vmatprep.subr.bf16.mxu0 0
    %243 = vmatpush1.bf16.msra.mxu0 0
    %244 = vmatprep.subr.bf16.mxu0 0
    %245 = vmatpush1.bf16.msra.mxu0 0
    %246 = vmatprep.subr.bf16.mxu0 0
    %247 = vmatpush1.bf16.msra.mxu0 0
    %248 = vmatprep.mubr.bf16.mxu0 0
    %249 = vmatmul.mubr.bf16.gmra.mrb[0].mxu0 %v214
    %v250 = vpop.f32.mrb[0].mxu0
    %v251 = vadd.f32 0.0, %v250
    %v252 = vpop.f32.mrb[0].mxu0
    %v253 = vpop.f32.mrb[0].mxu0
    %v254 = vpop.f32.mrb[0].mxu0
    %255 = vdwg.mxu0
    %v256 = vadd.f32 %v208, %v251
    %v257 = vxor.u32 %v256, 2147483648
    %v258 = vmul.f32 %v257, 1.442695
    %v259 = vpow.pop %v258
    %v260 = vadd.f32 %v259, 1.0
    %v261 = vrcp.pop %v260
    %v262 = vmul.f32 1.0, %v261
    %v263 = vtanh.pop %v256
    %v264 = vmul.f32 %v262, %v200
    %266 = vrot.lane.b32.xlu0 %v263, 64
    %v267 = vpop.permute.xlu0 %266
    %v269 = vmul.f32 %v262, %v267
    %271 = vrot.lane.b32.xlu0 %v269, 32
    %v272 = vpop.permute.xlu0 %271
    %v274 = vadd.f32 %v264, %v272
    %v275 = vtanh.pop %v274
    %277 = vrot.lane.b32.xlu0 %v275, 64
    %v278 = vpop.permute.xlu0 %277
    %v280 = vmul.f32 %v262, %v278
    %s281 = scalar_lea.vmem %s0, 6
    %v282 = vld [vmem:[%s281] sm:$0x3]
    %v283 = vpack.c.bf16 %v280, %v280
    %285 = vrot.lane.b32.xlu0 %v283, 32
    %v286 = vpop.permute.xlu0 %285
    %v288 = vsel %vm60, %v286, 0
    %290 = vmatprep.subr.bf16.mxu0 0
    %291 = vmatpush1.bf16.msra.mxu0 %v56
    %292 = vmatprep.subr.bf16.mxu0 0
    %293 = vmatpush1.bf16.msra.mxu0 %v57
    %294 = vmatprep.subr.bf16.mxu0 0
    %295 = vmatpush1.bf16.msra.mxu0 0
    %296 = vmatprep.subr.bf16.mxu0 0
    %297 = vmatpush1.bf16.msra.mxu0 0
    %298 = vmatprep.subr.bf16.mxu0 0
    %299 = vmatpush1.bf16.msra.mxu0 0
    %300 = vmatprep.subr.bf16.mxu0 0
    %301 = vmatpush1.bf16.msra.mxu0 0
    %302 = vmatprep.subr.bf16.mxu0 0
    %303 = vmatpush1.bf16.msra.mxu0 0
    %304 = vmatprep.subr.bf16.mxu0 0
    %305 = vmatpush1.bf16.msra.mxu0 0
    %306 = vmatprep.subr.bf16.mxu0 0
    %307 = vmatpush1.bf16.msra.mxu0 0
    %308 = vmatprep.subr.bf16.mxu0 0
    %309 = vmatpush1.bf16.msra.mxu0 0
    %310 = vmatprep.subr.bf16.mxu0 0
    %311 = vmatpush1.bf16.msra.mxu0 0
    %312 = vmatprep.subr.bf16.mxu0 0
    %313 = vmatpush1.bf16.msra.mxu0 0
    %314 = vmatprep.subr.bf16.mxu0 0
    %315 = vmatpush1.bf16.msra.mxu0 0
    %316 = vmatprep.subr.bf16.mxu0 0
    %317 = vmatpush1.bf16.msra.mxu0 0
    %318 = vmatprep.subr.bf16.mxu0 0
    %319 = vmatpush1.bf16.msra.mxu0 0
    %320 = vmatprep.subr.bf16.mxu0 0
    %321 = vmatpush1.bf16.msra.mxu0 0
    %322 = vmatprep.mubr.bf16.mxu0 0
    %323 = vmatmul.mubr.bf16.gmra.mrb[0].mxu0 %v288
    %v324 = vpop.f32.mrb[0].mxu0
    %v325 = vadd.f32 0.0, %v324
    %v326 = vpop.f32.mrb[0].mxu0
    %v327 = vpop.f32.mrb[0].mxu0
    %v328 = vpop.f32.mrb[0].mxu0
    %329 = vdwg.mxu0
    %v330 = vadd.f32 %v282, %v325
    %v331 = vxor.u32 %v330, 2147483648
    %v332 = vmul.f32 %v331, 1.442695
    %v333 = vpow.pop %v332
    %v334 = vadd.f32 %v333, 1.0
    %v335 = vrcp.pop %v334
    %v336 = vmul.f32 1.0, %v335
    %v337 = vtanh.pop %v330
    %v338 = vmul.f32 %v336, %v274
    %340 = vrot.lane.b32.xlu0 %v337, 64
    %v341 = vpop.permute.xlu0 %340
    %v343 = vmul.f32 %v336, %v341
    %345 = vrot.lane.b32.xlu0 %v343, 32
    %v346 = vpop.permute.xlu0 %345
    %v348 = vadd.f32 %v338, %v346
    %v349 = vtanh.pop %v348
    %351 = vrot.lane.b32.xlu0 %v349, 64
    %v352 = vpop.permute.xlu0 %351
    %v354 = vmul.f32 %v336, %v352
    %s355 = scalar_lea.vmem %s0, 8
    %v356 = vld [vmem:[%s355] sm:$0x3]
    %v357 = vpack.c.bf16 %v354, %v354
    %359 = vrot.lane.b32.xlu0 %v357, 32
    %v360 = vpop.permute.xlu0 %359
    %v362 = vsel %vm60, %v360, 0
    %364 = vmatprep.subr.bf16.mxu0 0
    %365 = vmatpush1.bf16.msra.mxu0 %v56
    %366 = vmatprep.subr.bf16.mxu0 0
    %367 = vmatpush1.bf16.msra.mxu0 %v57
    %368 = vmatprep.subr.bf16.mxu0 0
    %369 = vmatpush1.bf16.msra.mxu0 0
    %370 = vmatprep.subr.bf16.mxu0 0
    %371 = vmatpush1.bf16.msra.mxu0 0
    %372 = vmatprep.subr.bf16.mxu0 0
    %373 = vmatpush1.bf16.msra.mxu0 0
    %374 = vmatprep.subr.bf16.mxu0 0
    %375 = vmatpush1.bf16.msra.mxu0 0
    %376 = vmatprep.subr.bf16.mxu0 0
    %377 = vmatpush1.bf16.msra.mxu0 0
    %378 = vmatprep.subr.bf16.mxu0 0
    %379 = vmatpush1.bf16.msra.mxu0 0
    %380 = vmatprep.subr.bf16.mxu0 0
    %381 = vmatpush1.bf16.msra.mxu0 0
    %382 = vmatprep.subr.bf16.mxu0 0
    %383 = vmatpush1.bf16.msra.mxu0 0
    %384 = vmatprep.subr.bf16.mxu0 0
    %385 = vmatpush1.bf16.msra.mxu0 0
    %386 = vmatprep.subr.bf16.mxu0 0
    %387 = vmatpush1.bf16.msra.mxu0 0
    %388 = vmatprep.subr.bf16.mxu0 0
    %389 = vmatpush1.bf16.msra.mxu0 0
    %390 = vmatprep.subr.bf16.mxu0 0
    %391 = vmatpush1.bf16.msra.mxu0 0
    %392 = vmatprep.subr.bf16.mxu0 0
    %393 = vmatpush1.bf16.msra.mxu0 0
    %394 = vmatprep.subr.bf16.mxu0 0
    %395 = vmatpush1.bf16.msra.mxu0 0
    %396 = vmatprep.mubr.bf16.mxu0 0
    %397 = vmatmul.mubr.bf16.gmra.mrb[0].mxu0 %v362
    %v398 = vpop.f32.mrb[0].mxu0
    %v399 = vadd.f32 0.0, %v398
    %v400 = vpop.f32.mrb[0].mxu0
    %v401 = vpop.f32.mrb[0].mxu0
    %v402 = vpop.f32.mrb[0].mxu0
    %403 = vdwg.mxu0
    %v404 = vadd.f32 %v356, %v399
    %v405 = vxor.u32 %v404, 2147483648
    %v406 = vmul.f32 %v405, 1.442695
    %v407 = vpow.pop %v406
    %v408 = vadd.f32 %v407, 1.0
    %v409 = vrcp.pop %v408
    %v410 = vmul.f32 1.0, %v409
    %v411 = vtanh.pop %v404
    %v412 = vmul.f32 %v410, %v348
    %414 = vrot.lane.b32.xlu0 %v411, 64
    %v415 = vpop.permute.xlu0 %414
    %v417 = vmul.f32 %v410, %v415
    %419 = vrot.lane.b32.xlu0 %v417, 32
    %v420 = vpop.permute.xlu0 %419
    %v422 = vadd.f32 %v412, %v420
    %v423 = vtanh.pop %v422
    %425 = vrot.lane.b32.xlu0 %v423, 64
    %v426 = vpop.permute.xlu0 %425
    %v428 = vmul.f32 %v410, %v426
    %s429 = scalar_lea.vmem %s0, 10
    %v430 = vld [vmem:[%s429] sm:$0x3]
    %v431 = vpack.c.bf16 %v428, %v428
    %433 = vrot.lane.b32.xlu0 %v431, 32
    %v434 = vpop.permute.xlu0 %433
    %v436 = vsel %vm60, %v434, 0
    %438 = vmatprep.subr.bf16.mxu0 0
    %439 = vmatpush1.bf16.msra.mxu0 %v56
    %440 = vmatprep.subr.bf16.mxu0 0
    %441 = vmatpush1.bf16.msra.mxu0 %v57
    %442 = vmatprep.subr.bf16.mxu0 0
    %443 = vmatpush1.bf16.msra.mxu0 0
    %444 = vmatprep.subr.bf16.mxu0 0
    %445 = vmatpush1.bf16.msra.mxu0 0
    %446 = vmatprep.subr.bf16.mxu0 0
    %447 = vmatpush1.bf16.msra.mxu0 0
    %448 = vmatprep.subr.bf16.mxu0 0
    %449 = vmatpush1.bf16.msra.mxu0 0
    %450 = vmatprep.subr.bf16.mxu0 0
    %451 = vmatpush1.bf16.msra.mxu0 0
    %452 = vmatprep.subr.bf16.mxu0 0
    %453 = vmatpush1.bf16.msra.mxu0 0
    %454 = vmatprep.subr.bf16.mxu0 0
    %455 = vmatpush1.bf16.msra.mxu0 0
    %456 = vmatprep.subr.bf16.mxu0 0
    %457 = vmatpush1.bf16.msra.mxu0 0
    %458 = vmatprep.subr.bf16.mxu0 0
    %459 = vmatpush1.bf16.msra.mxu0 0
    %460 = vmatprep.subr.bf16.mxu0 0
    %461 = vmatpush1.bf16.msra.mxu0 0
    %462 = vmatprep.subr.bf16.mxu0 0
    %463 = vmatpush1.bf16.msra.mxu0 0
    %464 = vmatprep.subr.bf16.mxu0 0
    %465 = vmatpush1.bf16.msra.mxu0 0
    %466 = vmatprep.subr.bf16.mxu0 0
    %467 = vmatpush1.bf16.msra.mxu0 0
    %468 = vmatprep.subr.bf16.mxu0 0
    %469 = vmatpush1.bf16.msra.mxu0 0
    %470 = vmatprep.mubr.bf16.mxu0 0
    %471 = vmatmul.mubr.bf16.gmra.mrb[0].mxu0 %v436
    %v472 = vpop.f32.mrb[0].mxu0
    %v473 = vadd.f32 0.0, %v472
    %v474 = vpop.f32.mrb[0].mxu0
    %v475 = vpop.f32.mrb[0].mxu0
    %v476 = vpop.f32.mrb[0].mxu0
    %477 = vdwg.mxu0
    %v478 = vadd.f32 %v430, %v473
    %v479 = vxor.u32 %v478, 2147483648
    %v480 = vmul.f32 %v479, 1.442695
    %v481 = vpow.pop %v480
    %v482 = vadd.f32 %v481, 1.0
    %v483 = vrcp.pop %v482
    %v484 = vmul.f32 1.0, %v483
    %v485 = vtanh.pop %v478
    %v486 = vmul.f32 %v484, %v422
    %488 = vrot.lane.b32.xlu0 %v485, 64
    %v489 = vpop.permute.xlu0 %488
    %v491 = vmul.f32 %v484, %v489
    %493 = vrot.lane.b32.xlu0 %v491, 32
    %v494 = vpop.permute.xlu0 %493
    %v496 = vadd.f32 %v486, %v494
    %v497 = vtanh.pop %v496
    %499 = vrot.lane.b32.xlu0 %v497, 64
    %v500 = vpop.permute.xlu0 %499
    %v502 = vmul.f32 %v484, %v500
    %s503 = scalar_lea.vmem %s0, 12
    %v504 = vld [vmem:[%s503] sm:$0x3]
    %v505 = vpack.c.bf16 %v502, %v502
    %507 = vrot.lane.b32.xlu0 %v505, 32
    %v508 = vpop.permute.xlu0 %507
    %v510 = vsel %vm60, %v508, 0
    %512 = vmatprep.subr.bf16.mxu0 0
    %513 = vmatpush1.bf16.msra.mxu0 %v56
    %514 = vmatprep.subr.bf16.mxu0 0
    %515 = vmatpush1.bf16.msra.mxu0 %v57
    %516 = vmatprep.subr.bf16.mxu0 0
    %517 = vmatpush1.bf16.msra.mxu0 0
    %518 = vmatprep.subr.bf16.mxu0 0
    %519 = vmatpush1.bf16.msra.mxu0 0
    %520 = vmatprep.subr.bf16.mxu0 0
    %521 = vmatpush1.bf16.msra.mxu0 0
    %522 = vmatprep.subr.bf16.mxu0 0
    %523 = vmatpush1.bf16.msra.mxu0 0
    %524 = vmatprep.subr.bf16.mxu0 0
    %525 = vmatpush1.bf16.msra.mxu0 0
    %526 = vmatprep.subr.bf16.mxu0 0
    %527 = vmatpush1.bf16.msra.mxu0 0
    %528 = vmatprep.subr.bf16.mxu0 0
    %529 = vmatpush1.bf16.msra.mxu0 0
    %530 = vmatprep.subr.bf16.mxu0 0
    %531 = vmatpush1.bf16.msra.mxu0 0
    %532 = vmatprep.subr.bf16.mxu0 0
    %533 = vmatpush1.bf16.msra.mxu0 0
    %534 = vmatprep.subr.bf16.mxu0 0
    %535 = vmatpush1.bf16.msra.mxu0 0
    %536 = vmatprep.subr.bf16.mxu0 0
    %537 = vmatpush1.bf16.msra.mxu0 0
    %538 = vmatprep.subr.bf16.mxu0 0
    %539 = vmatpush1.bf16.msra.mxu0 0
    %540 = vmatprep.subr.bf16.mxu0 0
    %541 = vmatpush1.bf16.msra.mxu0 0
    %542 = vmatprep.subr.bf16.mxu0 0
    %543 = vmatpush1.bf16.msra.mxu0 0
    %544 = vmatprep.mubr.bf16.mxu0 0
    %545 = vmatmul.mubr.bf16.gmra.mrb[0].mxu0 %v510
    %v546 = vpop.f32.mrb[0].mxu0
    %v547 = vadd.f32 0.0, %v546
    %v548 = vpop.f32.mrb[0].mxu0
    %v549 = vpop.f32.mrb[0].mxu0
    %v550 = vpop.f32.mrb[0].mxu0
    %551 = vdwg.mxu0
    %v552 = vadd.f32 %v504, %v547
    %v553 = vxor.u32 %v552, 2147483648
    %v554 = vmul.f32 %v553, 1.442695
    %v555 = vpow.pop %v554
    %v556 = vadd.f32 %v555, 1.0
    %v557 = vrcp.pop %v556
    %v558 = vmul.f32 1.0, %v557
    %v559 = vtanh.pop %v552
    %v560 = vmul.f32 %v558, %v496
    %562 = vrot.lane.b32.xlu0 %v559, 64
    %v563 = vpop.permute.xlu0 %562
    %v565 = vmul.f32 %v558, %v563
    %567 = vrot.lane.b32.xlu0 %v565, 32
    %v568 = vpop.permute.xlu0 %567
    %v570 = vadd.f32 %v560, %v568
    %v571 = vtanh.pop %v570
    %573 = vrot.lane.b32.xlu0 %v571, 64
    %v574 = vpop.permute.xlu0 %573
    %v576 = vmul.f32 %v558, %v574
    %s577 = scalar_lea.vmem %s0, 14
    %v578 = vld [vmem:[%s577] sm:$0x3]
    %v579 = vpack.c.bf16 %v576, %v576
    %581 = vrot.lane.b32.xlu0 %v579, 32
    %v582 = vpop.permute.xlu0 %581
    %v584 = vsel %vm60, %v582, 0
    %586 = vmatprep.subr.bf16.mxu0 0
    %587 = vmatpush1.bf16.msra.mxu0 %v56
    %588 = vmatprep.subr.bf16.mxu0 0
    %589 = vmatpush1.bf16.msra.mxu0 %v57
    %590 = vmatprep.subr.bf16.mxu0 0
    %591 = vmatpush1.bf16.msra.mxu0 0
    %592 = vmatprep.subr.bf16.mxu0 0
    %593 = vmatpush1.bf16.msra.mxu0 0
    %594 = vmatprep.subr.bf16.mxu0 0
    %595 = vmatpush1.bf16.msra.mxu0 0
    %596 = vmatprep.subr.bf16.mxu0 0
    %597 = vmatpush1.bf16.msra.mxu0 0
    %598 = vmatprep.subr.bf16.mxu0 0
    %599 = vmatpush1.bf16.msra.mxu0 0
    %600 = vmatprep.subr.bf16.mxu0 0
    %601 = vmatpush1.bf16.msra.mxu0 0
    %602 = vmatprep.subr.bf16.mxu0 0
    %603 = vmatpush1.bf16.msra.mxu0 0
    %604 = vmatprep.subr.bf16.mxu0 0
    %605 = vmatpush1.bf16.msra.mxu0 0
    %606 = vmatprep.subr.bf16.mxu0 0
    %607 = vmatpush1.bf16.msra.mxu0 0
    %608 = vmatprep.subr.bf16.mxu0 0
    %609 = vmatpush1.bf16.msra.mxu0 0
    %610 = vmatprep.subr.bf16.mxu0 0
    %611 = vmatpush1.bf16.msra.mxu0 0
    %612 = vmatprep.subr.bf16.mxu0 0
    %613 = vmatpush1.bf16.msra.mxu0 0
    %614 = vmatprep.subr.bf16.mxu0 0
    %615 = vmatpush1.bf16.msra.mxu0 0
    %616 = vmatprep.subr.bf16.mxu0 0
    %617 = vmatpush1.bf16.msra.mxu0 0
    %618 = vmatprep.mubr.bf16.mxu0 0
    %619 = vmatmul.mubr.bf16.gmra.mrb[0].mxu0 %v584
    %v620 = vpop.f32.mrb[0].mxu0
    %v621 = vadd.f32 0.0, %v620
    %v622 = vpop.f32.mrb[0].mxu0
    %v623 = vpop.f32.mrb[0].mxu0
    %v624 = vpop.f32.mrb[0].mxu0
    %625 = vdwg.mxu0
    %v626 = vadd.f32 %v578, %v621
    %v627 = vxor.u32 %v626, 2147483648
    %v628 = vmul.f32 %v627, 1.442695
    %v629 = vpow.pop %v628
    %v630 = vadd.f32 %v629, 1.0
    %v631 = vrcp.pop %v630
    %v632 = vmul.f32 1.0, %v631
    %v633 = vtanh.pop %v626
    %v634 = vmul.f32 %v632, %v570
    %636 = vrot.lane.b32.xlu0 %v633, 64
    %v637 = vpop.permute.xlu0 %636
    %v639 = vmul.f32 %v632, %v637
    %641 = vrot.lane.b32.xlu0 %v639, 32
    %v642 = vpop.permute.xlu0 %641
    %v644 = vadd.f32 %v634, %v642
    %v645 = vtanh.pop %v644
    %647 = vrot.lane.b32.xlu0 %v645, 64
    %v648 = vpop.permute.xlu0 %647
    %v650 = vmul.f32 %v632, %v648
    %652 = vrot.lane.b32.xlu0 %v650, 32
    %v653 = vpop.permute.xlu0 %652
    %vm655 = vcmask 254976
    %656 = vst.msk [vmem:[#allocation2] sm:$0x3] %vm655, %v653
    %658 = vrot.lane.b32.xlu0 %v644, 96
    %v659 = vpop.permute.xlu0 %658
    %661 = vst.msk [vmem:[#allocation3] sm:$0x3] %vm655, %v659
    // Predicated region
    $region26: #{tpu_custom_call.1} parent=1 // pred_check
      %p662 = pneg %p33
    $region27: #{tpu_custom_call.1} parent=1 // pred_check_branch
      %664 = sbr.rel (%p662) target = $region29
    $region28: #{tpu_custom_call.1} parent=1 // pred_region
      %v665 = vpack.c.bf16 %v650, %v650
      %v666 = vld [vmem:[%s2] sm:$0xf]
      %v667 = vld [vmem:[%s2 + $0x4] sm:$0xf]
      %v668 = vld [vmem:[%s2 + $0x8] sm:$0xf]
      %v669 = vld [vmem:[%s2 + $0xc] sm:$0xf]
      %v670 = vld [vmem:[%s3] sm:$0x1]
      %v672 = vlaneseq
      %v673 = vshrl.u32 %v672, 7
      %v674 = vsub.s32 0, %v673
      %v675 = vrot.slane %v670, %v674
      %678 = vrot.lane.b32.xlu0 %v665, 32
      %v679 = vpop.permute.xlu0 %678
      %v684 = vunpack.c.l.b16 %v666
      %v685 = vunpack.c.l.b16 %v667
      %v686 = vunpack.c.l.b16 %v668
      %v687 = vunpack.c.l.b16 %v669
      %v688 = vpack.c.b16 %v685, %v684
      %v689 = vpack.c.b16 %v687, %v686
      %v693 = vsel %vm60, %v679, 0
      %695 = vmatprep.subr.bf16.mxu0 0
      %696 = vmatpush1.bf16.msra.mxu0 %v688
      %697 = vmatprep.subr.bf16.mxu0 0
      %698 = vmatpush1.bf16.msra.mxu0 %v689
      %699 = vmatprep.subr.bf16.mxu0 0
      %700 = vmatpush1.bf16.msra.mxu0 0
      %701 = vmatprep.subr.bf16.mxu0 0
      %702 = vmatpush1.bf16.msra.mxu0 0
      %703 = vmatprep.subr.bf16.mxu0 0
      %704 = vmatpush1.bf16.msra.mxu0 0
      %705 = vmatprep.subr.bf16.mxu0 0
      %706 = vmatpush1.bf16.msra.mxu0 0
      %707 = vmatprep.subr.bf16.mxu0 0
      %708 = vmatpush1.bf16.msra.mxu0 0
      %709 = vmatprep.subr.bf16.mxu0 0
      %710 = vmatpush1.bf16.msra.mxu0 0
      %711 = vmatprep.subr.bf16.mxu0 0
      %712 = vmatpush1.bf16.msra.mxu0 0
      %713 = vmatprep.subr.bf16.mxu0 0
      %714 = vmatpush1.bf16.msra.mxu0 0
      %715 = vmatprep.subr.bf16.mxu0 0
      %716 = vmatpush1.bf16.msra.mxu0 0
      %717 = vmatprep.subr.bf16.mxu0 0
      %718 = vmatpush1.bf16.msra.mxu0 0
      %719 = vmatprep.subr.bf16.mxu0 0
      %720 = vmatpush1.bf16.msra.mxu0 0
      %721 = vmatprep.subr.bf16.mxu0 0
      %722 = vmatpush1.bf16.msra.mxu0 0
      %723 = vmatprep.subr.bf16.mxu0 0
      %724 = vmatpush1.bf16.msra.mxu0 0
      %725 = vmatprep.subr.bf16.mxu0 0
      %726 = vmatpush1.bf16.msra.mxu0 0
      %727 = vmatprep.mubr.bf16.mxu0 0
      %728 = vmatmul.mubr.bf16.gmra.mrb[0].mxu0 %v693
      %v729 = vpop.f32.mrb[0].mxu0
      %v730 = vadd.f32 %v675, %v729
      %v731 = vpop.f32.mrb[0].mxu0
      %v732 = vpop.f32.mrb[0].mxu0
      %v733 = vpop.f32.mrb[0].mxu0
      %734 = vdwg.mxu0
      %vm735 = vcmask 58368
      %736 = vst.msk [vmem:[#allocation7] sm:$0x3] %vm735, %v730
    $region29: #{tpu_custom_call.1} parent=1 // pred_fallthru
      _
    // Predicated region
    $region30: #{tpu_custom_call.1} parent=1 // pred_check
      _
    $region31: #{tpu_custom_call.1} parent=1 // pred_check_branch
      %738 = sbr.rel (0) target = $region33
    $region32: #{tpu_custom_call.1} parent=1 // pred_region
      %s740 = ssub.s32 32, 32
      %741 = vsyncadd [#allocation6], %s740
      %s743 = sshll.u32 [#allocation7], 4
      %s744 = int_to_ptr.vmem [resolvable:$true] %s743
      %746 = dma.vmem_to_hbm [thread:$0]  %s744, 32, %s4, [#allocation6]
    $region33: #{tpu_custom_call.1} parent=1 // pred_fallthru
      _
    // Predicated region
    $region34: #{tpu_custom_call.1} parent=1 // pred_check
      _
    $region35: #{tpu_custom_call.1} parent=1 // pred_check_branch
      %748 = sbr.rel (0) target = $region37
    $region36: #{tpu_custom_call.1} parent=1 // pred_region
      %749 = dma.done [#allocation6], 32
    $region37: #{tpu_custom_call.1} parent=1 // pred_fallthru
      _
    %750 = vsyncpa [#allocation5], 1
    %751 = vsyncpa [#allocation6], 1

</llo_original>
